<compile_context>
chip_gen: v5e
topology: v5e:2x2
jax: 0.10.0
libtpu: 0.0.40
codegen_flags: <defaults>
</compile_context>

<pallas_src>
import functools

import jax
import jax.numpy as jnp
from jax.experimental import pallas as pl
from jax.experimental.pallas import tpu as pltpu

_LANE = 128
_BF16_PACK = 16  # bf16 vreg holds [16, 128]


def _round_up(x, m):
    return ((x + m - 1) // m) * m


def _pad_feature(d):
    """Lane-pad a feature dim; use 256 multiples once past 128 (256-wide MXU on v6e/v7x)."""
    p = _round_up(d, _LANE)
    if p > _LANE:
        p = _round_up(d, 2 * _LANE)
    return p


def _mlp_kernel(x_ref, w1_ref, b1_ref, w2_ref, b2_ref, w3_ref, b3_ref, o_ref):
    # x / w* are bf16 (MXU-native). f32 accumulation; bias-add & ReLU in f32 (VPU).
    # Weights arrive pre-transposed as [in_features, out_features] -> plain dot, no in-kernel .T.
    x = x_ref[...]
    h1 = jnp.dot(x, w1_ref[...], preferred_element_type=jnp.float32)
    h1 = jnp.maximum(h1 + b1_ref[...], 0.0)
    h2 = jnp.dot(h1.astype(jnp.bfloat16), w2_ref[...],
                 preferred_element_type=jnp.float32)
    h2 = jnp.maximum(h2 + b2_ref[...], 0.0)
    h3 = jnp.dot(h2.astype(jnp.bfloat16), w3_ref[...],
                 preferred_element_type=jnp.float32)
    o_ref[...] = (h3 + b3_ref[...]).astype(o_ref.dtype)  # bf16 lane-dense store


def prepare_mynet_params(w1, b1, w2, b2, w3, b3):
    """One-time weight prep (call OUTSIDE the per-step jit).

    PyTorch layout w*: [out, in], b*: [out].  Returns padded [in_p, out_p] bf16 weights
    and padded [1, out_p] f32 biases, ready to be held VMEM-resident by the kernel.
    """
    input_size = w1.shape[1]
    output_size = w3.shape[0]
    in_p = _round_up(input_size, _LANE)
    hid_p = _pad_feature(w1.shape[0])
    out_p = _pad_feature(output_size)

    def prep_w(w, k_pad, n_pad):
        wt = jnp.transpose(jnp.asarray(w, jnp.float32))  # [in, out] -- one-time
        wt = jnp.pad(wt, ((0, k_pad - wt.shape[0]), (0, n_pad - wt.shape[1])))
        return wt.astype(jnp.bfloat16)

    def prep_b(b, n_pad):
        b2d = jnp.asarray(b, jnp.float32).reshape(1, -1)
        return jnp.pad(b2d, ((0, 0), (0, n_pad - b2d.shape[-1])))

    return (prep_w(w1, in_p, hid_p), prep_b(b1, hid_p),
            prep_w(w2, hid_p, hid_p), prep_b(b2, hid_p),
            prep_w(w3, hid_p, out_p), prep_b(b3, out_p))


def mynet_forward(x, params, *, output_size, batch_tile=512):
    """x: [batch, input] (f32); params: output of prepare_mynet_params. Returns [batch, output_size]."""
    w1p, b1p, w2p, b2p, w3p, b3p = params
    batch, input_size = x.shape
    in_p, hid_p = w1p.shape
    out_p = w3p.shape[1]

    # Batch tiling: pack rows to the bf16 sublane factor (16); guarantee >= 2 grid
    # steps whenever the batch allows it (keeps v7x's second TensorCore busy).
    pb_min = _round_up(batch, _BF16_PACK)
    if pb_min >= 2 * batch_tile:
        tb = batch_tile
    elif pb_min >= 2 * _BF16_PACK:
        tb = _round_up((pb_min + 1) // 2, _BF16_PACK)
    else:
        tb = pb_min
    pb = _round_up(batch, tb)
    grid = (pb // tb,)

    xp = jnp.pad(x, ((0, pb - batch), (0, in_p - input_size))).astype(jnp.bfloat16)

    # VMEM budget: single-buffered bf16 weights + f32 biases, double-buffered bf16
    # x/out tiles, f32 intermediates; 2x headroom, capped by this generation's VMEM.
    est = (2 * (in_p * hid_p + hid_p * hid_p + hid_p * out_p)   # bf16 weights (1x buffered)
           + 4 * (2 * hid_p + out_p)                            # f32 biases
           + 2 * 2 * tb * in_p                                  # bf16 x tile, 2x buffered
           + 2 * 2 * tb * out_p                                 # bf16 out tile, 2x buffered
           + 4 * tb * (2 * hid_p + out_p))                      # f32 intermediates
    try:
        vmem_cap = int(pltpu.get_tpu_info().vmem_capacity_bytes)
    except Exception:
        vmem_cap = 64 << 20  # conservative: v7x per-TC VMEM
    vmem_limit = int(min(max(2 * est, 16 << 20), max(vmem_cap - (16 << 20), 16 << 20)))

    def _call(single_buffer_weights):
        if single_buffer_weights:
            def cspec(shape):
                return pl.BlockSpec(shape, lambda i: (0, 0),
                                    pipeline_mode=pl.Buffered(1))
        else:
            def cspec(shape):
                return pl.BlockSpec(shape, lambda i: (0, 0))
        return pl.pallas_call(
            _mlp_kernel,
            out_shape=jax.ShapeDtypeStruct((pb, out_p), jnp.bfloat16),
            grid=grid,
            in_specs=[
                pl.BlockSpec((tb, in_p), lambda i: (i, 0)),   # x: batch-tiled stream
                cspec((in_p, hid_p)),                         # W1: VMEM-resident
                cspec((1, hid_p)),                            # b1
                cspec((hid_p, hid_p)),                        # W2
                cspec((1, hid_p)),                            # b2
                cspec((hid_p, out_p)),                        # W3
                cspec((1, out_p)),                            # b3
            ],
            out_specs=pl.BlockSpec((tb, out_p), lambda i: (i, 0)),
            compiler_params=pltpu.CompilerParams(
                dimension_semantics=("parallel",),
                vmem_limit_bytes=vmem_limit,
            ),
        )(xp, w1p, b1p, w2p, b2p, w3p, b3p)

    try:
        out_padded = _call(True)
    except Exception:
        # Fallback for environments where Buffered(1) pipeline_mode is unsupported.
        out_padded = _call(False)

    # bf16 writeback halves HBM output bytes; slice + upcast to the caller dtype here.
    return out_padded[:batch, :output_size].astype(x.dtype)


if __name__ == "__main__":
    # Small shapes implied by the module (feature-vector Linear layers).
    batch = 8
    input_size = 16
    hidden_size = 32
    output_size = 8

    # Deterministic params matching MyNet.__init__: weights = 1.0, biases = 0.0.
    w1 = jnp.ones((hidden_size, input_size), jnp.float32)
    b1 = jnp.zeros((hidden_size,), jnp.float32)
    w2 = jnp.ones((hidden_size, hidden_size), jnp.float32)
    b2 = jnp.zeros((hidden_size,), jnp.float32)
    w3 = jnp.ones((output_size, hidden_size), jnp.float32)
    b3 = jnp.zeros((output_size,), jnp.float32)

    key = jax.random.PRNGKey(0)
    x = jax.random.normal(key, (batch, input_size), dtype=jnp.float32)

    # One-time weight prep, hoisted out of the per-call jitted path.
    params = prepare_mynet_params(w1, b1, w2, b2, w3, b3)

    fwd = jax.jit(functools.partial(mynet_forward, output_size=output_size))
    out = jax.block_until_ready(fwd(x, params))

    # Reference with the same mixed precision (bf16 matmul operands, f32 accumulate,
    # bf16 writeback), matching the PyTorch structure: relu(fc1) -> relu(fc2) -> fc3.
    def ref(xv):
        h = jnp.dot(xv.astype(jnp.bfloat16), w1.T.astype(jnp.bfloat16),
                    preferred_element_type=jnp.float32) + b1
        h = jnp.maximum(h, 0.0)
        h = jnp.dot(h.astype(jnp.bfloat16), w2.T.astype(jnp.bfloat16),
                    preferred_element_type=jnp.float32) + b2
        h = jnp.maximum(h, 0.0)
        h = jnp.dot(h.astype(jnp.bfloat16), w3.T.astype(jnp.bfloat16),
                    preferred_element_type=jnp.float32) + b3
        return h.astype(jnp.bfloat16).astype(jnp.float32)

    expected = ref(x)
    assert out.shape == (batch, output_size)
    assert out.dtype == x.dtype
    assert jnp.allclose(out, expected, atol=5e-2, rtol=2e-2), "mismatch vs reference"

    print("KERNEL_OK")
</pallas_src>

<mosaic_0001>
module attributes {stable_mosaic.version = 11 : i64} {
  func.func @_mlp_kernel(%arg0: i32, %arg1: memref<16x128xbf16, #tpu.memory_space<vmem>>, %arg2: memref<128x128xbf16, #tpu.memory_space<vmem>>, %arg3: memref<1x128xf32, #tpu.memory_space<vmem>>, %arg4: memref<128x128xbf16, #tpu.memory_space<vmem>>, %arg5: memref<1x128xf32, #tpu.memory_space<vmem>>, %arg6: memref<128x128xbf16, #tpu.memory_space<vmem>>, %arg7: memref<1x128xf32, #tpu.memory_space<vmem>>, %arg8: memref<16x128xbf16, #tpu.memory_space<vmem>>) attributes {dimension_semantics = [#tpu.dimension_semantics<parallel>], iteration_bounds = array<i64: 1>, scalar_prefetch = 0 : i64, scratch_operands = 0 : i64, tpu.core_type = #tpu.core_type<tc>, window_params = [{transform_indices = @transform_0, window_bounds = array<i64: 16, 128>}, {pipeline_mode = #tpu.pipeline_mode<synchronous>, transform_indices = @transform_1, window_bounds = array<i64: 128, 128>}, {pipeline_mode = #tpu.pipeline_mode<synchronous>, transform_indices = @transform_2, window_bounds = array<i64: 1, 128>}, {pipeline_mode = #tpu.pipeline_mode<synchronous>, transform_indices = @transform_3, window_bounds = array<i64: 128, 128>}, {pipeline_mode = #tpu.pipeline_mode<synchronous>, transform_indices = @transform_4, window_bounds = array<i64: 1, 128>}, {pipeline_mode = #tpu.pipeline_mode<synchronous>, transform_indices = @transform_5, window_bounds = array<i64: 128, 128>}, {pipeline_mode = #tpu.pipeline_mode<synchronous>, transform_indices = @transform_6, window_bounds = array<i64: 1, 128>}, {transform_indices = @transform_7, window_bounds = array<i64: 16, 128>}]} {
    %c0 = arith.constant 0 : index
    %c0_0 = arith.constant 0 : index
    %0 = vector.load %arg1[%c0, %c0_0] : memref<16x128xbf16, #tpu.memory_space<vmem>>, vector<16x128xbf16>
    %c0_1 = arith.constant 0 : index
    %c0_2 = arith.constant 0 : index
    %1 = vector.load %arg2[%c0_1, %c0_2] : memref<128x128xbf16, #tpu.memory_space<vmem>>, vector<128x128xbf16>
    %cst = arith.constant dense<0.000000e+00> : vector<16x128xf32>
    %2 = tpu.matmul %0, %1, %cst {dimension_numbers = #tpu.dot_dimension_numbers<[1], [0], [0], [1], [0, 0, 1, 1], [], []>} : vector<16x128xbf16>, vector<128x128xbf16>, vector<16x128xf32> -> vector<16x128xf32>
    %c0_3 = arith.constant 0 : index
    %c0_4 = arith.constant 0 : index
    %3 = vector.load %arg3[%c0_3, %c0_4] : memref<1x128xf32, #tpu.memory_space<vmem>>, vector<1x128xf32>
    %4 = vector.broadcast %3 : vector<1x128xf32> to vector<16x128xf32>
    %5 = arith.addf %2, %4 : vector<16x128xf32>
    %cst_5 = arith.constant 0.000000e+00 : f32
    %6 = vector.broadcast %cst_5 : f32 to vector<16x128xf32>
    %7 = arith.maximumf %5, %6 : vector<16x128xf32>
    %8 = arith.truncf %7 : vector<16x128xf32> to vector<16x128xbf16>
    %c0_6 = arith.constant 0 : index
    %c0_7 = arith.constant 0 : index
    %9 = vector.load %arg4[%c0_6, %c0_7] : memref<128x128xbf16, #tpu.memory_space<vmem>>, vector<128x128xbf16>
    %cst_8 = arith.constant dense<0.000000e+00> : vector<16x128xf32>
    %10 = tpu.matmul %8, %9, %cst_8 {dimension_numbers = #tpu.dot_dimension_numbers<[1], [0], [0], [1], [0, 0, 1, 1], [], []>} : vector<16x128xbf16>, vector<128x128xbf16>, vector<16x128xf32> -> vector<16x128xf32>
    %c0_9 = arith.constant 0 : index
    %c0_10 = arith.constant 0 : index
    %11 = vector.load %arg5[%c0_9, %c0_10] : memref<1x128xf32, #tpu.memory_space<vmem>>, vector<1x128xf32>
    %12 = vector.broadcast %11 : vector<1x128xf32> to vector<16x128xf32>
    %13 = arith.addf %10, %12 : vector<16x128xf32>
    %cst_11 = arith.constant 0.000000e+00 : f32
    %14 = vector.broadcast %cst_11 : f32 to vector<16x128xf32>
    %15 = arith.maximumf %13, %14 : vector<16x128xf32>
    %16 = arith.truncf %15 : vector<16x128xf32> to vector<16x128xbf16>
    %c0_12 = arith.constant 0 : index
    %c0_13 = arith.constant 0 : index
    %17 = vector.load %arg6[%c0_12, %c0_13] : memref<128x128xbf16, #tpu.memory_space<vmem>>, vector<128x128xbf16>
    %cst_14 = arith.constant dense<0.000000e+00> : vector<16x128xf32>
    %18 = tpu.matmul %16, %17, %cst_14 {dimension_numbers = #tpu.dot_dimension_numbers<[1], [0], [0], [1], [0, 0, 1, 1], [], []>} : vector<16x128xbf16>, vector<128x128xbf16>, vector<16x128xf32> -> vector<16x128xf32>
    %c0_15 = arith.constant 0 : index
    %c0_16 = arith.constant 0 : index
    %19 = vector.load %arg7[%c0_15, %c0_16] : memref<1x128xf32, #tpu.memory_space<vmem>>, vector<1x128xf32>
    %20 = vector.broadcast %19 : vector<1x128xf32> to vector<16x128xf32>
    %21 = arith.addf %18, %20 : vector<16x128xf32>
    %22 = arith.truncf %21 : vector<16x128xf32> to vector<16x128xbf16>
    %c0_17 = arith.constant 0 : index
    %c0_18 = arith.constant 0 : index
    %23 = vector.load %arg8[%c0_17, %c0_18] : memref<16x128xbf16, #tpu.memory_space<vmem>>, vector<16x128xbf16>
    tpu.vector_store %arg8[%c0_17, %c0_18], %22 {strides = array<i32>} : memref<16x128xbf16, #tpu.memory_space<vmem>>, vector<16x128xbf16>,
    return
  }
  func.func @transform_0(%arg0: i32) -> (i32, i32) {
    %c0_i32 = arith.constant 0 : i32
    %c0_i32_0 = arith.constant 0 : i32
    return %arg0, %c0_i32 : i32, i32
  }
  func.func @transform_1(%arg0: i32) -> (i32, i32) {
    %c0_i32 = arith.constant 0 : i32
    %c0_i32_0 = arith.constant 0 : i32
    %c0_i32_1 = arith.constant 0 : i32
    return %c0_i32, %c0_i32_0 : i32, i32
  }
  func.func @transform_2(%arg0: i32) -> (i32, i32) {
    %c0_i32 = arith.constant 0 : i32
    %c0_i32_0 = arith.constant 0 : i32
    %c0_i32_1 = arith.constant 0 : i32
    return %c0_i32, %c0_i32_0 : i32, i32
  }
  func.func @transform_3(%arg0: i32) -> (i32, i32) {
    %c0_i32 = arith.constant 0 : i32
    %c0_i32_0 = arith.constant 0 : i32
    %c0_i32_1 = arith.constant 0 : i32
    return %c0_i32, %c0_i32_0 : i32, i32
  }
  func.func @transform_4(%arg0: i32) -> (i32, i32) {
    %c0_i32 = arith.constant 0 : i32
    %c0_i32_0 = arith.constant 0 : i32
    %c0_i32_1 = arith.constant 0 : i32
    return %c0_i32, %c0_i32_0 : i32, i32
  }
  func.func @transform_5(%arg0: i32) -> (i32, i32) {
    %c0_i32 = arith.constant 0 : i32
    %c0_i32_0 = arith.constant 0 : i32
    %c0_i32_1 = arith.constant 0 : i32
    return %c0_i32, %c0_i32_0 : i32, i32
  }
  func.func @transform_6(%arg0: i32) -> (i32, i32) {
    %c0_i32 = arith.constant 0 : i32
    %c0_i32_0 = arith.constant 0 : i32
    %c0_i32_1 = arith.constant 0 : i32
    return %c0_i32, %c0_i32_0 : i32, i32
  }
  func.func @transform_7(%arg0: i32) -> (i32, i32) {
    %c0_i32 = arith.constant 0 : i32
    %c0_i32_0 = arith.constant 0 : i32
    return %arg0, %c0_i32 : i32, i32
  }
}

</mosaic_0001>

<llo_original>
// kernel: mynet_forward.1
$region0: #{mynet_forward.1}
  #allocation0 [shape = 'u32[]', space=smem, size = 0x4, offset = 0x4, fixed_abs, tag = 'smem constant byte address 0x4 - core index']
  #allocation1 [shape = 'u32[72,128]{1,0:T(1,128)}', space=vmem, size = 0x9000, scoped, tag = 'internal scratch']
  %s0 = inlined_call_operand.vmem [shape: bf16[16,128], index: 0, kind: input, shape index: {}]
  %s1 = inlined_call_operand.hbm [shape: bf16[128,128], index: 1, kind: input, shape index: {}]
  %s2 = inlined_call_operand.vmem [shape: f32[1,128], index: 2, kind: input, shape index: {}]
  %s3 = inlined_call_operand.hbm [shape: bf16[128,128], index: 3, kind: input, shape index: {}]
  %s4 = inlined_call_operand.vmem [shape: f32[1,128], index: 4, kind: input, shape index: {}]
  %s5 = inlined_call_operand.hbm [shape: bf16[128,128], index: 5, kind: input, shape index: {}]
  %s6 = inlined_call_operand.vmem [shape: f32[1,128], index: 6, kind: input, shape index: {}]
  %s7 = inlined_call_operand.vmem [shape: bf16[16,128], index: 7, kind: output, shape index: {}]
  %s8 = sld [smem:[#allocation0]]
  $region50: #{mynet_forward.1} parent=0
    _
  %s10 = ssub.s32 1, %s8
  %s11 = scalar_select 0, %s10, %s8
  $region1: #{mynet_forward.1} parent=0
    #allocation2 [shape = 'u8[32768]{0}', space=vmem, size = 0x8000, scoped, tag = 'input window, operand 1, single buffered']
    #allocation3 [shape = 's32[1]{0}', space=sflag, size = 0x4, scoped, tag = 'scoped memory for mynet_forward.1']
    #allocation4 [shape = 'u8[32768]{0}', space=vmem, size = 0x8000, scoped, tag = 'input window, operand 3, single buffered']
    #allocation5 [shape = 's32[1]{0}', space=sflag, size = 0x4, scoped, tag = 'scoped memory for mynet_forward.1']
    #allocation6 [shape = 'u8[32768]{0}', space=vmem, size = 0x8000, scoped, tag = 'input window, operand 5, single buffered']
    %12 = vsyncpa [#allocation3], 0
    %13 = vsyncpa [#allocation5], 0
    // Predicated region
    $region2: #{mynet_forward.1} parent=1 // pred_check
      _
    $region3: #{mynet_forward.1} parent=1 // pred_check_branch
      %15 = sbr.rel (0) target = $region5
    $region4: #{mynet_forward.1} parent=1 // pred_region
      _
    $region5: #{mynet_forward.1} parent=1 // pred_fallthru
      _
    // Predicated region
    $region6: #{mynet_forward.1} parent=1 // pred_check
      _
    $region7: #{mynet_forward.1} parent=1 // pred_check_branch
      %17 = sbr.rel (0) target = $region9
    $region8: #{mynet_forward.1} parent=1 // pred_region
      %19 = vsyncadd [#allocation3], 0
      %s20 = sshll.u32 %s1, 4
      %s21 = int_to_ptr.hbm [resolvable:$true] %s20
      %s22 = sshll.u32 [#allocation2], 4
      %s23 = int_to_ptr.vmem [resolvable:$true] %s22
      %28 = dma.hbm_to_vmem [thread:$0]  %s21, 1024, %s23, [#allocation3], 64, 64, 4
    $region9: #{mynet_forward.1} parent=1 // pred_fallthru
      _
    // Predicated region
    $region10: #{mynet_forward.1} parent=1 // pred_check
      _
    $region11: #{mynet_forward.1} parent=1 // pred_check_branch
      %30 = sbr.rel (0) target = $region13
    $region12: #{mynet_forward.1} parent=1 // pred_region
      _
    $region13: #{mynet_forward.1} parent=1 // pred_fallthru
      _
    // Predicated region
    $region14: #{mynet_forward.1} parent=1 // pred_check
      _
    $region15: #{mynet_forward.1} parent=1 // pred_check_branch
      %32 = sbr.rel (0) target = $region17
    $region16: #{mynet_forward.1} parent=1 // pred_region
      %34 = vsyncadd [#allocation5], 0
      %s35 = sshll.u32 %s3, 4
      %s36 = int_to_ptr.hbm [resolvable:$true] %s35
      %s37 = sshll.u32 [#allocation4], 4
      %s38 = int_to_ptr.vmem [resolvable:$true] %s37
      %43 = dma.hbm_to_vmem [thread:$0]  %s36, 1024, %s38, [#allocation5], 64, 64, 4
    $region17: #{mynet_forward.1} parent=1 // pred_fallthru
      _
    // Predicated region
    $region18: #{mynet_forward.1} parent=1 // pred_check
      _
    $region19: #{mynet_forward.1} parent=1 // pred_check_branch
      %45 = sbr.rel (0) target = $region21
    $region20: #{mynet_forward.1} parent=1 // pred_region
      _
    $region21: #{mynet_forward.1} parent=1 // pred_fallthru
      _
    // Predicated region
    $region22: #{mynet_forward.1} parent=1 // pred_check
      _
    $region23: #{mynet_forward.1} parent=1 // pred_check_branch
      %47 = sbr.rel (0) target = $region25
    $region24: #{mynet_forward.1} parent=1 // pred_region
      %49 = vsyncadd [#allocation5], 0
      %s50 = sshll.u32 %s5, 4
      %s51 = int_to_ptr.hbm [resolvable:$true] %s50
      %s52 = sshll.u32 [#allocation6], 4
      %s53 = int_to_ptr.vmem [resolvable:$true] %s52
      %58 = dma.hbm_to_vmem [thread:$0]  %s51, 1024, %s53, [#allocation5], 64, 64, 4
    $region25: #{mynet_forward.1} parent=1 // pred_fallthru
      _
    // Predicated region
    $region26: #{mynet_forward.1} parent=1 // pred_check
      _
    $region27: #{mynet_forward.1} parent=1 // pred_check_branch
      %60 = sbr.rel (0) target = $region29
    $region28: #{mynet_forward.1} parent=1 // pred_region
      _
    $region29: #{mynet_forward.1} parent=1 // pred_fallthru
      _
    // Predicated region
    $region30: #{mynet_forward.1} parent=1 // pred_check
      _
    $region31: #{mynet_forward.1} parent=1 // pred_check_branch
      %62 = sbr.rel (0) target = $region33
    $region32: #{mynet_forward.1} parent=1 // pred_region
      %64 = dma.done [#allocation3], 1024
    $region33: #{mynet_forward.1} parent=1 // pred_fallthru
      _
    // Predicated region
    $region34: #{mynet_forward.1} parent=1 // pred_check
      _
    $region35: #{mynet_forward.1} parent=1 // pred_check_branch
      %66 = sbr.rel (0) target = $region37
    $region36: #{mynet_forward.1} parent=1 // pred_region
      %68 = dma.done [#allocation5], 1024
    $region37: #{mynet_forward.1} parent=1 // pred_fallthru
      _
    // Predicated region
    $region38: #{mynet_forward.1} parent=1 // pred_check
      _
    $region39: #{mynet_forward.1} parent=1 // pred_check_branch
      %70 = sbr.rel (0) target = $region41
    $region40: #{mynet_forward.1} parent=1 // pred_region
      %72 = dma.done [#allocation5], 1024
    $region41: #{mynet_forward.1} parent=1 // pred_fallthru
      _
    %v73 = vld [vmem:[%s0] sm:$0xf]
    %v74 = vld [vmem:[%s0 + $0x4] sm:$0xf]
    %v75 = vld [vmem:[#allocation2] sm:$0xf]
    %v76 = vld [vmem:[#allocation2 + $0x4] sm:$0xf]
    %v77 = vld [vmem:[#allocation2 + $0x8] sm:$0xf]
    %v78 = vld [vmem:[#allocation2 + $0xc] sm:$0xf]
    %v79 = vld [vmem:[#allocation2 + $0x10] sm:$0xf]
    %v80 = vld [vmem:[#allocation2 + $0x14] sm:$0xf]
    %v81 = vld [vmem:[#allocation2 + $0x18] sm:$0xf]
    %v82 = vld [vmem:[#allocation2 + $0x1c] sm:$0xf]
    %v83 = vld [vmem:[#allocation2 + $0x20] sm:$0xf]
    %v84 = vld [vmem:[#allocation2 + $0x24] sm:$0xf]
    %v85 = vld [vmem:[#allocation2 + $0x28] sm:$0xf]
    %v86 = vld [vmem:[#allocation2 + $0x2c] sm:$0xf]
    %v87 = vld [vmem:[#allocation2 + $0x30] sm:$0xf]
    %v88 = vld [vmem:[#allocation2 + $0x34] sm:$0xf]
    %v89 = vld [vmem:[#allocation2 + $0x38] sm:$0xf]
    %v90 = vld [vmem:[#allocation2 + $0x3c] sm:$0xf]
    %v91 = vld [vmem:[%s2] sm:$0x1]
    %v93 = vperm.slane %v91, 0
    %v97 = vunpack.c.l.b16 %v73
    %v98 = vunpack.c.l.b16 %v74
    %v99 = vpack.c.b16 %v98, %v97
    %v117 = vunpack.c.l.b16 %v75
    %v118 = vunpack.c.l.b16 %v76
    %v119 = vunpack.c.l.b16 %v77
    %v120 = vunpack.c.l.b16 %v78
    %v121 = vunpack.c.l.b16 %v79
    %v122 = vunpack.c.l.b16 %v80
    %v123 = vunpack.c.l.b16 %v81
    %v124 = vunpack.c.l.b16 %v82
    %v125 = vunpack.c.l.b16 %v83
    %v126 = vunpack.c.l.b16 %v84
    %v127 = vunpack.c.l.b16 %v85
    %v128 = vunpack.c.l.b16 %v86
    %v129 = vunpack.c.l.b16 %v87
    %v130 = vunpack.c.l.b16 %v88
    %v131 = vunpack.c.l.b16 %v89
    %v132 = vunpack.c.l.b16 %v90
    %v133 = vpack.c.b16 %v118, %v117
    %v134 = vpack.c.b16 %v120, %v119
    %v135 = vpack.c.b16 %v122, %v121
    %v136 = vpack.c.b16 %v124, %v123
    %v137 = vpack.c.b16 %v126, %v125
    %v138 = vpack.c.b16 %v128, %v127
    %v139 = vpack.c.b16 %v130, %v129
    %v140 = vpack.c.b16 %v132, %v131
    %149 = vmatpush.bf16.msra.mxu0 %v140
    %150 = vmatpush.bf16.msra.mxu0 %v139
    %151 = vmatpush.bf16.msra.mxu0 %v138
    %152 = vmatpush.bf16.msra.mxu0 %v137
    %153 = vmatpush.bf16.msra.mxu0 %v136
    %154 = vmatpush.bf16.msra.mxu0 %v135
    %155 = vmatpush.bf16.msra.mxu0 %v134
    %156 = vmatpush.bf16.msra.mxu0 %v133
    %157 = vmatmul.bf16.gmra.mxu0 %v99
    %v158 = vpop.f32.mrf.mxu0
    %v159 = vadd.f32 %v93, %v158
    %v160 = vpop.f32.mrf.mxu0
    %v161 = vadd.f32 %v93, %v160
    %162 = vdwg.mxu0
    %v163 = vmax.f32 %v159, 0.0
    %v164 = vmax.f32 %v161, 0.0
    %v165 = vpack.c.bf16 %v164, %v163
    %v166 = vld [vmem:[#allocation4] sm:$0xf]
    %v167 = vld [vmem:[#allocation4 + $0x4] sm:$0xf]
    %v168 = vld [vmem:[#allocation4 + $0x8] sm:$0xf]
    %v169 = vld [vmem:[#allocation4 + $0xc] sm:$0xf]
    %v170 = vld [vmem:[#allocation4 + $0x10] sm:$0xf]
    %v171 = vld [vmem:[#allocation4 + $0x14] sm:$0xf]
    %v172 = vld [vmem:[#allocation4 + $0x18] sm:$0xf]
    %v173 = vld [vmem:[#allocation4 + $0x1c] sm:$0xf]
    %v174 = vld [vmem:[#allocation4 + $0x20] sm:$0xf]
    %v175 = vld [vmem:[#allocation4 + $0x24] sm:$0xf]
    %v176 = vld [vmem:[#allocation4 + $0x28] sm:$0xf]
    %v177 = vld [vmem:[#allocation4 + $0x2c] sm:$0xf]
    %v178 = vld [vmem:[#allocation4 + $0x30] sm:$0xf]
    %v179 = vld [vmem:[#allocation4 + $0x34] sm:$0xf]
    %v180 = vld [vmem:[#allocation4 + $0x38] sm:$0xf]
    %v181 = vld [vmem:[#allocation4 + $0x3c] sm:$0xf]
    %v182 = vld [vmem:[%s4] sm:$0x1]
    %v184 = vperm.slane %v182, 0
    %v202 = vunpack.c.l.b16 %v166
    %v203 = vunpack.c.l.b16 %v167
    %v204 = vunpack.c.l.b16 %v168
    %v205 = vunpack.c.l.b16 %v169
    %v206 = vunpack.c.l.b16 %v170
    %v207 = vunpack.c.l.b16 %v171
    %v208 = vunpack.c.l.b16 %v172
    %v209 = vunpack.c.l.b16 %v173
    %v210 = vunpack.c.l.b16 %v174
    %v211 = vunpack.c.l.b16 %v175
    %v212 = vunpack.c.l.b16 %v176
    %v213 = vunpack.c.l.b16 %v177
    %v214 = vunpack.c.l.b16 %v178
    %v215 = vunpack.c.l.b16 %v179
    %v216 = vunpack.c.l.b16 %v180
    %v217 = vunpack.c.l.b16 %v181
    %v218 = vpack.c.b16 %v203, %v202
    %v219 = vpack.c.b16 %v205, %v204
    %v220 = vpack.c.b16 %v207, %v206
    %v221 = vpack.c.b16 %v209, %v208
    %v222 = vpack.c.b16 %v211, %v210
    %v223 = vpack.c.b16 %v213, %v212
    %v224 = vpack.c.b16 %v215, %v214
    %v225 = vpack.c.b16 %v217, %v216
    %234 = vmatpush.bf16.msra.mxu0 %v225
    %235 = vmatpush.bf16.msra.mxu0 %v224
    %236 = vmatpush.bf16.msra.mxu0 %v223
    %237 = vmatpush.bf16.msra.mxu0 %v222
    %238 = vmatpush.bf16.msra.mxu0 %v221
    %239 = vmatpush.bf16.msra.mxu0 %v220
    %240 = vmatpush.bf16.msra.mxu0 %v219
    %241 = vmatpush.bf16.msra.mxu0 %v218
    %242 = vmatmul.bf16.gmra.mxu0 %v165
    %v243 = vpop.f32.mrf.mxu0
    %v244 = vadd.f32 %v184, %v243
    %v245 = vpop.f32.mrf.mxu0
    %v246 = vadd.f32 %v184, %v245
    %247 = vdwg.mxu0
    %v248 = vmax.f32 %v244, 0.0
    %v249 = vmax.f32 %v246, 0.0
    %v250 = vpack.c.bf16 %v249, %v248
    %v251 = vld [vmem:[#allocation6] sm:$0xf]
    %v252 = vld [vmem:[#allocation6 + $0x4] sm:$0xf]
    %v253 = vld [vmem:[#allocation6 + $0x8] sm:$0xf]
    %v254 = vld [vmem:[#allocation6 + $0xc] sm:$0xf]
    %v255 = vld [vmem:[#allocation6 + $0x10] sm:$0xf]
    %v256 = vld [vmem:[#allocation6 + $0x14] sm:$0xf]
    %v257 = vld [vmem:[#allocation6 + $0x18] sm:$0xf]
    %v258 = vld [vmem:[#allocation6 + $0x1c] sm:$0xf]
    %v259 = vld [vmem:[#allocation6 + $0x20] sm:$0xf]
    %v260 = vld [vmem:[#allocation6 + $0x24] sm:$0xf]
    %v261 = vld [vmem:[#allocation6 + $0x28] sm:$0xf]
    %v262 = vld [vmem:[#allocation6 + $0x2c] sm:$0xf]
    %v263 = vld [vmem:[#allocation6 + $0x30] sm:$0xf]
    %v264 = vld [vmem:[#allocation6 + $0x34] sm:$0xf]
    %v265 = vld [vmem:[#allocation6 + $0x38] sm:$0xf]
    %v266 = vld [vmem:[#allocation6 + $0x3c] sm:$0xf]
    %v267 = vld [vmem:[%s6] sm:$0x1]
    %v269 = vperm.slane %v267, 0
    %v287 = vunpack.c.l.b16 %v251
    %v288 = vunpack.c.l.b16 %v252
    %v289 = vunpack.c.l.b16 %v253
    %v290 = vunpack.c.l.b16 %v254
    %v291 = vunpack.c.l.b16 %v255
    %v292 = vunpack.c.l.b16 %v256
    %v293 = vunpack.c.l.b16 %v257
    %v294 = vunpack.c.l.b16 %v258
    %v295 = vunpack.c.l.b16 %v259
    %v296 = vunpack.c.l.b16 %v260
    %v297 = vunpack.c.l.b16 %v261
    %v298 = vunpack.c.l.b16 %v262
    %v299 = vunpack.c.l.b16 %v263
    %v300 = vunpack.c.l.b16 %v264
    %v301 = vunpack.c.l.b16 %v265
    %v302 = vunpack.c.l.b16 %v266
    %v303 = vpack.c.b16 %v288, %v287
    %v304 = vpack.c.b16 %v290, %v289
    %v305 = vpack.c.b16 %v292, %v291
    %v306 = vpack.c.b16 %v294, %v293
    %v307 = vpack.c.b16 %v296, %v295
    %v308 = vpack.c.b16 %v298, %v297
    %v309 = vpack.c.b16 %v300, %v299
    %v310 = vpack.c.b16 %v302, %v301
    %319 = vmatpush.bf16.msra.mxu0 %v310
    %320 = vmatpush.bf16.msra.mxu0 %v309
    %321 = vmatpush.bf16.msra.mxu0 %v308
    %322 = vmatpush.bf16.msra.mxu0 %v307
    %323 = vmatpush.bf16.msra.mxu0 %v306
    %324 = vmatpush.bf16.msra.mxu0 %v305
    %325 = vmatpush.bf16.msra.mxu0 %v304
    %326 = vmatpush.bf16.msra.mxu0 %v303
    %327 = vmatmul.bf16.gmra.mxu0 %v250
    %v328 = vpop.f32.mrf.mxu0
    %v329 = vadd.f32 %v269, %v328
    %v330 = vpop.f32.mrf.mxu0
    %v331 = vadd.f32 %v269, %v330
    %332 = vdwg.mxu0
    %v333 = vpack.c.bf16 %v329, %v329
    %v334 = vpack.c.bf16 %v331, %v331
    %335 = vst [vmem:[%s7] sm:$0xf] %v333
    %336 = vst [vmem:[%s7 + $0x4] sm:$0xf] %v334
    // Predicated region
    $region42: #{mynet_forward.1} parent=1 // pred_check
      _
    $region43: #{mynet_forward.1} parent=1 // pred_check_branch
      %338 = sbr.rel (0) target = $region45
    $region44: #{mynet_forward.1} parent=1 // pred_region
      _
    $region45: #{mynet_forward.1} parent=1 // pred_fallthru
      _
    // Predicated region
    $region46: #{mynet_forward.1} parent=1 // pred_check
      _
    $region47: #{mynet_forward.1} parent=1 // pred_check_branch
      %340 = sbr.rel (0) target = $region49
    $region48: #{mynet_forward.1} parent=1 // pred_region
      _
    $region49: #{mynet_forward.1} parent=1 // pred_fallthru
      _
    %341 = vsyncpa [#allocation3], 1
    %342 = vsyncpa [#allocation5], 1

</llo_original>
